<compile_context>
chip_gen: v7x
topology: tpu7x:2x2x1
jax: 0.10.0
libtpu: 0.0.40
codegen_flags: <defaults>
</compile_context>

<pallas_src>
import functools
import math

import jax
import jax.numpy as jnp
from jax.experimental import pallas as pl
from jax.experimental.pallas import tpu as pltpu

H1, H2 = 500, 300          # logical hidden sizes (PyTorch Actor)
H1P, H2P = 512, 384        # lane-padded hidden sizes used by the kernels
BN_EPS = 1e-5


def _round_up(n, m):
    return ((n + m - 1) // m) * m


# ---------------------------------------------------------------------------
# Pass 1: fc1 + BN batch statistics, reduced over all batch tiles.
# Emits the fused per-feature affine:  bn(h1) == h1 * scale + shift.
# ---------------------------------------------------------------------------
def _stats_kernel(n_rows, x_ref, w1_ref, gb_ref, aff_ref, sum_ref, sq_ref):
    i = pl.program_id(0)

    @pl.when(i == 0)
    def _():
        sum_ref[...] = jnp.zeros_like(sum_ref)
        sq_ref[...] = jnp.zeros_like(sq_ref)
        aff_ref[...] = jnp.zeros_like(aff_ref)

    x = x_ref[...].astype(jnp.bfloat16)                    # in-kernel cast
    h1 = jnp.dot(x, w1_ref[...], preferred_element_type=jnp.float32)
    sum_ref[...] += jnp.sum(h1, axis=0, keepdims=True)
    sq_ref[...] += jnp.sum(h1 * h1, axis=0, keepdims=True)

    @pl.when(i == pl.num_programs(0) - 1)
    def _():
        inv_n = 1.0 / n_rows                               # true batch size (static)
        mean = sum_ref[...] * inv_n
        var = jnp.maximum(sq_ref[...] * inv_n - mean * mean, 0.0)
        rstd = jax.lax.rsqrt(var + BN_EPS)
        scale = gb_ref[0:1, :] * rstd                      # gamma * rstd
        aff_ref[0:1, :] = scale
        aff_ref[1:2, :] = gb_ref[1:2, :] - mean * scale    # beta - mean*scale


# ---------------------------------------------------------------------------
# Pass 2: fc1 (recomputed, cheap) -> BN affine -> relu -> fc2 -> relu
#         -> fc3 -> tanh; one batch tile per grid step.
# ---------------------------------------------------------------------------
def _fwd_kernel(x_ref, w1_ref, aff_ref, w2_ref, b2_ref, w3_ref, b3_ref, o_ref):
    x = x_ref[...].astype(jnp.bfloat16)
    h1 = jnp.dot(x, w1_ref[...], preferred_element_type=jnp.float32)
    a1 = jnp.maximum(h1 * aff_ref[0:1, :] + aff_ref[1:2, :], 0.0)
    a1 = a1.astype(jnp.bfloat16)
    h2 = jnp.dot(a1, w2_ref[...], preferred_element_type=jnp.float32) + b2_ref[...]
    a2 = jnp.maximum(h2, 0.0).astype(jnp.bfloat16)
    h3 = jnp.dot(a2, w3_ref[...], preferred_element_type=jnp.float32) + b3_ref[...]
    o_ref[...] = jnp.tanh(h3)


def actor_forward(x, prepped, action_size, block_b=256):
    """x: [B, state_size] f32.  prepped: padded/bf16 params from prepare_params."""
    B, S = x.shape
    AP = prepped["w3"].shape[1]                 # lane-dense padded action dim

    tb = min(_round_up(max(B, 1), 8), _round_up(block_b, 8))
    b_pad = _round_up(B, tb)
    if b_pad != B:
        # Zero rows are BN-inert: with no fc1 bias they map to h1 == 0 exactly,
        # contributing nothing to the batch sum / sum-of-squares.
        x = jnp.zeros((b_pad, S), x.dtype).at[:B, :].set(x)
    nb = b_pad // tb

    tile = lambda i: (i, 0)
    const = lambda i: (0, 0)

    # ---- pass 1: per-feature BN affine over the true batch (reduction) ----
    aff = pl.pallas_call(
        functools.partial(_stats_kernel, float(B)),
        out_shape=jax.ShapeDtypeStruct((2, H1P), jnp.float32),
        grid=(nb,),
        in_specs=[
            pl.BlockSpec((tb, S), tile),
            pl.BlockSpec((S, H1P), const),
            pl.BlockSpec((2, H1P), const),
        ],
        out_specs=pl.BlockSpec((2, H1P), const),
        scratch_shapes=[pltpu.VMEM((1, H1P), jnp.float32),
                        pltpu.VMEM((1, H1P), jnp.float32)],
        compiler_params=pltpu.CompilerParams(
            dimension_semantics=("arbitrary",)),
    )(x, prepped["w1"], prepped["gb"])

    # ---- pass 2: the full MLP, batch-tiled, weights resident in VMEM ----
    out_padded = pl.pallas_call(
        _fwd_kernel,
        out_shape=jax.ShapeDtypeStruct((b_pad, AP), jnp.float32),
        grid=(nb,),
        in_specs=[
            pl.BlockSpec((tb, S), tile),
            pl.BlockSpec((S, H1P), const),
            pl.BlockSpec((2, H1P), const),
            pl.BlockSpec((H1P, H2P), const),
            pl.BlockSpec((1, H2P), const),
            pl.BlockSpec((H2P, AP), const),
            pl.BlockSpec((1, AP), const),
        ],
        out_specs=pl.BlockSpec((tb, AP), tile),
        compiler_params=pltpu.CompilerParams(
            dimension_semantics=("parallel",)),     # megacore on v7x; no-op on v5e/v6e
    )(x, prepped["w1"], aff, prepped["w2"], prepped["b2"],
      prepped["w3"], prepped["b3"])

    return out_padded[:B, :action_size]


def init_params(key, state_size, action_size):
    # Mirrors Actor.reset_parameters():
    #   fc1.weight ~ U(-1/sqrt(500), 1/sqrt(500))  (hidden_init uses size()[0]=out_features)
    #   fc2.weight ~ U(-1/sqrt(300), 1/sqrt(300))
    #   fc3.weight ~ U(-3e-3, 3e-3)
    # Biases keep PyTorch default: U(-1/sqrt(in_features), 1/sqrt(in_features)).
    # BN: gamma=1, beta=0.  (Logical, unpadded, f32 parameters.)
    ks = jax.random.split(key, 6)
    lim1 = 1.0 / math.sqrt(H1)
    lim2 = 1.0 / math.sqrt(H2)
    lim3 = 3e-3
    blim1 = 1.0 / math.sqrt(state_size)
    blim2 = 1.0 / math.sqrt(H1)
    blim3 = 1.0 / math.sqrt(H2)
    return {
        "w1": jax.random.uniform(ks[0], (state_size, H1), jnp.float32, -lim1, lim1),
        "b1": jax.random.uniform(ks[1], (1, H1), jnp.float32, -blim1, blim1),
        "gamma": jnp.ones((1, H1), jnp.float32),
        "beta": jnp.zeros((1, H1), jnp.float32),
        "w2": jax.random.uniform(ks[2], (H1, H2), jnp.float32, -lim2, lim2),
        "b2": jax.random.uniform(ks[3], (1, H2), jnp.float32, -blim2, blim2),
        "w3": jax.random.uniform(ks[4], (H2, action_size), jnp.float32, -lim3, lim3),
        "b3": jax.random.uniform(ks[5], (1, action_size), jnp.float32, -blim3, blim3),
    }


def prepare_params(p, state_size, action_size):
    """Zero-pad to lane multiples, cast matmul weights to bf16, pack gamma/beta.

    fc1's bias (p["b1"]) is intentionally dropped: training-mode BatchNorm
    subtracts the batch mean, so a per-feature pre-BN bias cancels exactly.
    """
    ap = _round_up(max(action_size, 1), 128)

    def pad2(a, rows, cols, dtype=jnp.float32):
        out = jnp.zeros((rows, cols), jnp.float32)
        return out.at[:a.shape[0], :a.shape[1]].set(a).astype(dtype)

    return {
        "w1": pad2(p["w1"], state_size, H1P, jnp.bfloat16),
        "gb": jnp.concatenate(
            [pad2(p["gamma"], 1, H1P), pad2(p["beta"], 1, H1P)], axis=0),
        "w2": pad2(p["w2"], H1P, H2P, jnp.bfloat16),
        "b2": pad2(p["b2"], 1, H2P),
        "w3": pad2(p["w3"], H2P, ap, jnp.bfloat16),
        "b3": pad2(p["b3"], 1, ap),
    }


def actor_ref(x, p):
    """Pure-JAX reference emulating the kernel's bf16 matmul quantization
    (f32 accumulation).  fc1's bias is KEPT here to verify that the kernel's
    dropping of it is exactly cancelled by the BN mean subtraction."""
    bf, f32 = jnp.bfloat16, jnp.float32
    xq = x.astype(bf).astype(f32)
    w1 = p["w1"].astype(bf).astype(f32)
    w2 = p["w2"].astype(bf).astype(f32)
    w3 = p["w3"].astype(bf).astype(f32)

    h1 = xq @ w1 + p["b1"]
    mean = jnp.mean(h1, axis=0, keepdims=True)
    d = h1 - mean
    var = jnp.mean(d * d, axis=0, keepdims=True)
    rstd = jax.lax.rsqrt(var + BN_EPS)
    scale = p["gamma"] * rstd
    shift = p["beta"] - mean * scale
    a1 = jnp.maximum(h1 * scale + shift, 0.0).astype(bf).astype(f32)
    a2 = jnp.maximum(a1 @ w2 + p["b2"], 0.0).astype(bf).astype(f32)
    return jnp.tanh(a2 @ w3 + p["b3"])


if __name__ == "__main__":
    state_size, action_size, batch = 32, 8, 256
    key = jax.random.PRNGKey(0)
    pkey, xkey = jax.random.split(key)

    params = init_params(pkey, state_size, action_size)
    prepped = prepare_params(params, state_size, action_size)
    x = jax.random.normal(xkey, (batch, state_size), jnp.float32)

    # block_b=128 -> 2 batch tiles: exercises the tiled-BN accumulation and
    # the pipelined/parallel batch grid.
    out = actor_forward(x, prepped, action_size, block_b=128)
    out = jax.block_until_ready(out)

    ref = actor_ref(x, params)
    assert out.shape == (batch, action_size)
    err = float(jnp.max(jnp.abs(out - ref)))
    assert err < 2e-3, f"mismatch vs pure-JAX reference: {err}"
    print("KERNEL_OK")
</pallas_src>

<mosaic_0001>
module attributes {stable_mosaic.version = 11 : i64} {
  func.func @_stats_kernel(%arg0: i32, %arg1: memref<128x32xf32, #tpu.memory_space<vmem>>, %arg2: memref<32x512xbf16, #tpu.memory_space<vmem>>, %arg3: memref<2x512xf32, #tpu.memory_space<vmem>>, %arg4: memref<2x512xf32, #tpu.memory_space<vmem>>, %arg5: memref<1x512xf32, #tpu.memory_space<vmem>>, %arg6: memref<1x512xf32, #tpu.memory_space<vmem>>) attributes {dimension_semantics = [#tpu.dimension_semantics<arbitrary>], iteration_bounds = array<i64: 2>, scalar_prefetch = 0 : i64, scratch_operands = 2 : i64, tpu.core_type = #tpu.core_type<tc>, window_params = [{transform_indices = @transform_0, window_bounds = array<i64: 128, 32>}, {pipeline_mode = #tpu.pipeline_mode<synchronous>, transform_indices = @transform_1, window_bounds = array<i64: 32, 512>}, {pipeline_mode = #tpu.pipeline_mode<synchronous>, transform_indices = @transform_2, window_bounds = array<i64: 2, 512>}, {pipeline_mode = #tpu.pipeline_mode<synchronous>, transform_indices = @transform_3, window_bounds = array<i64: 2, 512>}]} {
    %c0_i32 = arith.constant 0 : i32
    %0 = arith.cmpi eq, %arg0, %c0_i32 : i32
    %1 = arith.extui %0 : i1 to i32
    %c0_i32_0 = arith.constant 0 : i32
    %2 = arith.cmpi ne, %1, %c0_i32_0 : i32
    scf.if %2 {
      %cst_15 = arith.constant 0.000000e+00 : f32
      %21 = vector.broadcast %cst_15 : f32 to vector<1x512xf32>
      %c0_16 = arith.constant 0 : index
      %c0_17 = arith.constant 0 : index
      %22 = vector.load %arg5[%c0_16, %c0_17] : memref<1x512xf32, #tpu.memory_space<vmem>>, vector<1x512xf32>
      tpu.vector_store %arg5[%c0_16, %c0_17], %21 {strides = array<i32>} : memref<1x512xf32, #tpu.memory_space<vmem>>, vector<1x512xf32>,
      %cst_18 = arith.constant 0.000000e+00 : f32
      %23 = vector.broadcast %cst_18 : f32 to vector<1x512xf32>
      %c0_19 = arith.constant 0 : index
      %c0_20 = arith.constant 0 : index
      %24 = vector.load %arg6[%c0_19, %c0_20] : memref<1x512xf32, #tpu.memory_space<vmem>>, vector<1x512xf32>
      tpu.vector_store %arg6[%c0_19, %c0_20], %23 {strides = array<i32>} : memref<1x512xf32, #tpu.memory_space<vmem>>, vector<1x512xf32>,
      %cst_21 = arith.constant 0.000000e+00 : f32
      %25 = vector.broadcast %cst_21 : f32 to vector<2x512xf32>
      %c0_22 = arith.constant 0 : index
      %c0_23 = arith.constant 0 : index
      %26 = vector.load %arg4[%c0_22, %c0_23] : memref<2x512xf32, #tpu.memory_space<vmem>>, vector<2x512xf32>
      tpu.vector_store %arg4[%c0_22, %c0_23], %25 {strides = array<i32>} : memref<2x512xf32, #tpu.memory_space<vmem>>, vector<2x512xf32>,
    } else {
    }
    %c0 = arith.constant 0 : index
    %c0_1 = arith.constant 0 : index
    %3 = vector.load %arg1[%c0, %c0_1] : memref<128x32xf32, #tpu.memory_space<vmem>>, vector<128x32xf32>
    %4 = arith.truncf %3 : vector<128x32xf32> to vector<128x32xbf16>
    %c0_2 = arith.constant 0 : index
    %c0_3 = arith.constant 0 : index
    %5 = vector.load %arg2[%c0_2, %c0_3] : memref<32x512xbf16, #tpu.memory_space<vmem>>, vector<32x512xbf16>
    %cst = arith.constant dense<0.000000e+00> : vector<128x512xf32>
    %6 = tpu.matmul %4, %5, %cst {dimension_numbers = #tpu.dot_dimension_numbers<[1], [0], [0], [1], [0, 0, 1, 1], [], []>} : vector<128x32xbf16>, vector<32x512xbf16>, vector<128x512xf32> -> vector<128x512xf32>
    %c0_4 = arith.constant 0 : index
    %c0_5 = arith.constant 0 : index
    %7 = vector.load %arg5[%c0_4, %c0_5] : memref<1x512xf32, #tpu.memory_space<vmem>>, vector<1x512xf32>
    %cst_6 = arith.constant dense<0.000000e+00> : vector<512xf32>
    %8 = vector.multi_reduction <add>, %6, %cst_6 [0] : vector<128x512xf32> to vector<512xf32>
    %9 = vector.shape_cast %8 : vector<512xf32> to vector<1x512xf32>
    %10 = arith.addf %7, %9 : vector<1x512xf32>
    %c0_7 = arith.constant 0 : index
    %c0_8 = arith.constant 0 : index
    %11 = vector.load %arg5[%c0_7, %c0_8] : memref<1x512xf32, #tpu.memory_space<vmem>>, vector<1x512xf32>
    tpu.vector_store %arg5[%c0_7, %c0_8], %10 {strides = array<i32>} : memref<1x512xf32, #tpu.memory_space<vmem>>, vector<1x512xf32>,
    %c0_9 = arith.constant 0 : index
    %c0_10 = arith.constant 0 : index
    %12 = vector.load %arg6[%c0_9, %c0_10] : memref<1x512xf32, #tpu.memory_space<vmem>>, vector<1x512xf32>
    %13 = arith.mulf %6, %6 : vector<128x512xf32>
    %cst_11 = arith.constant dense<0.000000e+00> : vector<512xf32>
    %14 = vector.multi_reduction <add>, %13, %cst_11 [0] : vector<128x512xf32> to vector<512xf32>
    %15 = vector.shape_cast %14 : vector<512xf32> to vector<1x512xf32>
    %16 = arith.addf %12, %15 : vector<1x512xf32>
    %c0_12 = arith.constant 0 : index
    %c0_13 = arith.constant 0 : index
    %17 = vector.load %arg6[%c0_12, %c0_13] : memref<1x512xf32, #tpu.memory_space<vmem>>, vector<1x512xf32>
    tpu.vector_store %arg6[%c0_12, %c0_13], %16 {strides = array<i32>} : memref<1x512xf32, #tpu.memory_space<vmem>>, vector<1x512xf32>,
    %c1_i32 = arith.constant 1 : i32
    %18 = arith.cmpi eq, %arg0, %c1_i32 : i32
    %19 = arith.extui %18 : i1 to i32
    %c0_i32_14 = arith.constant 0 : i32
    %20 = arith.cmpi ne, %19, %c0_i32_14 : i32
    scf.if %20 {
      %c0_15 = arith.constant 0 : index
      %c0_16 = arith.constant 0 : index
      %21 = vector.load %arg5[%c0_15, %c0_16] : memref<1x512xf32, #tpu.memory_space<vmem>>, vector<1x512xf32>
      %cst_17 = arith.constant 3.906250e-03 : f32
      %22 = vector.broadcast %cst_17 : f32 to vector<1x512xf32>
      %23 = arith.mulf %21, %22 : vector<1x512xf32>
      %c0_18 = arith.constant 0 : index
      %c0_19 = arith.constant 0 : index
      %24 = vector.load %arg6[%c0_18, %c0_19] : memref<1x512xf32, #tpu.memory_space<vmem>>, vector<1x512xf32>
      %cst_20 = arith.constant 3.906250e-03 : f32
      %25 = vector.broadcast %cst_20 : f32 to vector<1x512xf32>
      %26 = arith.mulf %24, %25 : vector<1x512xf32>
      %27 = arith.mulf %23, %23 : vector<1x512xf32>
      %28 = arith.subf %26, %27 : vector<1x512xf32>
      %cst_21 = arith.constant 0.000000e+00 : f32
      %29 = vector.broadcast %cst_21 : f32 to vector<1x512xf32>
      %30 = arith.maximumf %28, %29 : vector<1x512xf32>
      %cst_22 = arith.constant 9.99999974E-6 : f32
      %31 = vector.broadcast %cst_22 : f32 to vector<1x512xf32>
      %32 = arith.addf %30, %31 : vector<1x512xf32>
      %33 = math.rsqrt %32 : vector<1x512xf32>
      %c0_23 = arith.constant 0 : index
      %c0_24 = arith.constant 0 : index
      %34 = vector.load %arg3[%c0_23, %c0_24] : memref<2x512xf32, #tpu.memory_space<vmem>>, vector<1x512xf32>
      %35 = arith.mulf %34, %33 : vector<1x512xf32>
      %c0_25 = arith.constant 0 : index
      %c0_26 = arith.constant 0 : index
      %36 = vector.load %arg4[%c0_25, %c0_26] : memref<2x512xf32, #tpu.memory_space<vmem>>, vector<1x512xf32>
      tpu.vector_store %arg4[%c0_25, %c0_26], %35 {strides = array<i32>} : memref<2x512xf32, #tpu.memory_space<vmem>>, vector<1x512xf32>,
      %c1 = arith.constant 1 : index
      %c0_27 = arith.constant 0 : index
      %37 = vector.load %arg3[%c1, %c0_27] : memref<2x512xf32, #tpu.memory_space<vmem>>, vector<1x512xf32>
      %38 = arith.mulf %23, %35 : vector<1x512xf32>
      %39 = arith.subf %37, %38 : vector<1x512xf32>
      %c1_28 = arith.constant 1 : index
      %c0_29 = arith.constant 0 : index
      %40 = vector.load %arg4[%c1_28, %c0_29] : memref<2x512xf32, #tpu.memory_space<vmem>>, vector<1x512xf32>
      tpu.vector_store %arg4[%c1_28, %c0_29], %39 {strides = array<i32>} : memref<2x512xf32, #tpu.memory_space<vmem>>, vector<1x512xf32>,
    } else {
    }
    return
  }
  func.func @transform_0(%arg0: i32) -> (i32, i32) {
    %c0_i32 = arith.constant 0 : i32
    %c0_i32_0 = arith.constant 0 : i32
    return %arg0, %c0_i32 : i32, i32
  }
  func.func @transform_1(%arg0: i32) -> (i32, i32) {
    %c0_i32 = arith.constant 0 : i32
    %c0_i32_0 = arith.constant 0 : i32
    %c0_i32_1 = arith.constant 0 : i32
    return %c0_i32, %c0_i32_0 : i32, i32
  }
  func.func @transform_2(%arg0: i32) -> (i32, i32) {
    %c0_i32 = arith.constant 0 : i32
    %c0_i32_0 = arith.constant 0 : i32
    %c0_i32_1 = arith.constant 0 : i32
    return %c0_i32, %c0_i32_0 : i32, i32
  }
  func.func @transform_3(%arg0: i32) -> (i32, i32) {
    %c0_i32 = arith.constant 0 : i32
    %c0_i32_0 = arith.constant 0 : i32
    %c0_i32_1 = arith.constant 0 : i32
    return %c0_i32, %c0_i32_0 : i32, i32
  }
}

</mosaic_0001>

<llo_original>
// kernel: tpu_custom_call.1
$region0: #{tpu_custom_call.1}
  #allocation0 [shape = 'u32[]', space=smem, size = 0x4, offset = 0x4, fixed_abs, tag = 'smem constant byte address 0x4 - core index']
  #allocation1 [shape = 'u32[144,128]{1,0:T(1,128)}', space=vmem, size = 0x12000, scoped, tag = 'internal scratch']
  #allocation2 [shape = 'f32[1,512]{1,0:T(1,128)}', space=vmem, size = 0x800, scoped, tag = 'scratch operand']
  #allocation3 [shape = 'f32[1,512]{1,0:T(1,128)}', space=vmem, size = 0x800, scoped, tag = 'scratch operand']
  %s0 = inlined_call_operand.vmem [shape: f32[256,32], index: 0, kind: input, shape index: {}]
  %s1 = inlined_call_operand.vmem [shape: bf16[32,512], index: 1, kind: input, shape index: {}]
  %s2 = inlined_call_operand.vmem [shape: f32[2,512], index: 2, kind: input, shape index: {}]
  %s3 = inlined_call_operand.hbm [shape: f32[2,512], index: 3, kind: output, shape index: {}]
  %s4 = sld [smem:[#allocation0]]
  $region53: #{tpu_custom_call.1} parent=0
    _
  %s6 = ssub.s32 1, %s4
  %s7 = scalar_select 0, %s6, %s4
  $region1: #{tpu_custom_call.1} parent=0
    #allocation4 [shape = 'u8[4096]{0}', space=vmem, size = 0x1000, scoped, tag = 'output window, operand 0, single buffered']
    #allocation5 [shape = 's32[2]{0}', space=sflag, size = 0x8, scoped, tag = 'scoped memory for tpu_custom_call.1']
    %8 = vsyncpa [#allocation5], 0
    loop: start=0, step=1, limit=4
    $region2: #{tpu_custom_call.1} parent=1 // loop_pre_header
      _
    $region3: #{tpu_custom_call.1} parent=1 // loop_header
      %s10 = sphi 0, %s14
      %p11 = scmp.ge.s32.totalorder %s10, 4
      %s20 = sphi 0, %s22
      %s23 = sphi 0, %s20
      %s24 = sphi 0, %s23
      %s40 = sphi 0, %s24
      %s44 = sphi 0, %s44
      %s46 = sphi 0, %s44
      %s47 = sphi 0, %s46
      %s61 = sphi 0, %s47
      %s65 = sphi 0, %s65
      %s67 = sphi 0, %s65
      %s68 = sphi 0, %s67
      %s82 = sphi 0, %s68
      %s86 = sphi 0, %s86
      %s88 = sphi 0, %s86
      %s89 = sphi 0, %s88
      %s103 = sphi 0, %s89
    $region4: #{tpu_custom_call.1} parent=1 // loop_header_branch
      %13 = sbr.rel (%p11) target = $region8
    $region5: #{tpu_custom_call.1} parent=1 // loop_body
      %s15 = ssub.s32 %s10, 1
      %s16 = ssub.s32 %s10, 2
      %s17 = sadd.s32 %s10, 1
      %s18 = ssub.s32 %s10, %s17
      %p19 = scmp.eq.s32.totalorder %s18, 0
      %s21 = sadd.s32 %s20, 1
      %s22 = scalar_select %p19, %s20, %s21
      %p25 = pneg %p19
      %p26 = scmp.eq.s32.totalorder %s10, 1
      %p27 = por %p25, %p26
      %p28 = scmp.ne.s32.totalorder %s20, %s23
      %p29 = scmp.eq.s32.totalorder %s10, 0
      %p30 = por %p28, %p29
      %p31 = scmp.ne.s32.totalorder %s20, %s23
      %p32 = scmp.eq.s32.totalorder %s15, 1
      %p33 = por %p31, %p32
      %p34 = scmp.ne.s32.totalorder %s23, %s24
      %p35 = scmp.eq.s32.totalorder %s15, 0
      %p36 = por %p34, %p35
      %p37 = scmp.ne.s32.totalorder %s23, %s24
      %p38 = scmp.eq.s32.totalorder %s16, 1
      %p39 = por %p37, %p38
      %p41 = scmp.ne.s32.totalorder %s24, %s40
      %p42 = scmp.eq.s32.totalorder %s16, 0
      %p43 = por %p41, %p42
      %s45 = sadd.s32 %s44, 1
      %p48 = scmp.eq.s32.totalorder %s10, 1
      %p49 = scmp.ne.s32.totalorder %s44, %s46
      %p50 = scmp.eq.s32.totalorder %s10, 0
      %p51 = por %p49, %p50
      %p52 = scmp.ne.s32.totalorder %s44, %s46
      %p53 = scmp.eq.s32.totalorder %s15, 1
      %p54 = por %p52, %p53
      %p55 = scmp.ne.s32.totalorder %s46, %s47
      %p56 = scmp.eq.s32.totalorder %s15, 0
      %p57 = por %p55, %p56
      %p58 = scmp.ne.s32.totalorder %s46, %s47
      %p59 = scmp.eq.s32.totalorder %s16, 1
      %p60 = por %p58, %p59
      %p62 = scmp.ne.s32.totalorder %s47, %s61
      %p63 = scmp.eq.s32.totalorder %s16, 0
      %p64 = por %p62, %p63
      %s66 = sadd.s32 %s65, 1
      %p69 = scmp.eq.s32.totalorder %s10, 1
      %p70 = scmp.ne.s32.totalorder %s65, %s67
      %p71 = scmp.eq.s32.totalorder %s10, 0
      %p72 = por %p70, %p71
      %p73 = scmp.ne.s32.totalorder %s65, %s67
      %p74 = scmp.eq.s32.totalorder %s15, 1
      %p75 = por %p73, %p74
      %p76 = scmp.ne.s32.totalorder %s67, %s68
      %p77 = scmp.eq.s32.totalorder %s15, 0
      %p78 = por %p76, %p77
      %p79 = scmp.ne.s32.totalorder %s67, %s68
      %p80 = scmp.eq.s32.totalorder %s16, 1
      %p81 = por %p79, %p80
      %p83 = scmp.ne.s32.totalorder %s68, %s82
      %p84 = scmp.eq.s32.totalorder %s16, 0
      %p85 = por %p83, %p84
      %s87 = sadd.s32 %s86, 1
      %p90 = scmp.eq.s32.totalorder %s10, 1
      %p91 = scmp.ne.s32.totalorder %s86, %s88
      %p92 = scmp.eq.s32.totalorder %s10, 0
      %p93 = por %p91, %p92
      %p94 = scmp.ne.s32.totalorder %s86, %s88
      %p95 = scmp.eq.s32.totalorder %s15, 1
      %p96 = por %p94, %p95
      %p97 = scmp.ne.s32.totalorder %s88, %s89
      %p98 = scmp.eq.s32.totalorder %s15, 0
      %p99 = por %p97, %p98
      %p100 = scmp.ne.s32.totalorder %s88, %s89
      %p101 = scmp.eq.s32.totalorder %s16, 1
      %p102 = por %p100, %p101
      %p104 = scmp.ne.s32.totalorder %s89, %s103
      %p105 = scmp.eq.s32.totalorder %s16, 0
      %p106 = por %p104, %p105
      %p107 = scmp.le.s32.totalorder 1, %s10
      %p108 = scmp.lt.s32.totalorder %s10, 3
      %p109 = pnand %p107, %p108
      %p110 = pneg %p109
      // Predicated region
      $region9: #{tpu_custom_call.1} parent=5 // pred_check
        _
      $region10: #{tpu_custom_call.1} parent=5 // pred_check_branch
        %112 = sbr.rel (%p109) target = $region12
      $region11: #{tpu_custom_call.1} parent=5 // pred_region
        %s113 = ssub.s32 %s10, 1
        // Predicated region
        $region13: #{tpu_custom_call.1} parent=11 // pred_check
          %p114 = pneg %p57
        $region14: #{tpu_custom_call.1} parent=11 // pred_check_branch
          %116 = sbr.rel (%p114) target = $region16
        $region15: #{tpu_custom_call.1} parent=11 // pred_region
          _
        $region16: #{tpu_custom_call.1} parent=11 // pred_fallthru
          _
        // Predicated region
        $region17: #{tpu_custom_call.1} parent=11 // pred_check
          %p117 = pneg %p78
        $region18: #{tpu_custom_call.1} parent=11 // pred_check_branch
          %119 = sbr.rel (%p117) target = $region20
        $region19: #{tpu_custom_call.1} parent=11 // pred_region
          _
        $region20: #{tpu_custom_call.1} parent=11 // pred_fallthru
          _
      $region12: #{tpu_custom_call.1} parent=5 // pred_fallthru
        _
      %p120 = scmp.lt.s32.totalorder %s10, 2
      // Predicated region
      $region21: #{tpu_custom_call.1} parent=5 // pred_check
        %p121 = pneg %p120
      $region22: #{tpu_custom_call.1} parent=5 // pred_check_branch
        %123 = sbr.rel (%p121) target = $region24
      $region23: #{tpu_custom_call.1} parent=5 // pred_region
        // Predicated region
        $region25: #{tpu_custom_call.1} parent=23 // pred_check
          %p124 = pneg %p30
        $region26: #{tpu_custom_call.1} parent=23 // pred_check_branch
          %126 = sbr.rel (%p124) target = $region28
        $region27: #{tpu_custom_call.1} parent=23 // pred_region
          %s127 = smul.u32 16, %s10
          %p128 = scmp.lt.s32.totalorder %s127, 31
          %s129 = scalar_select %p128, %s127, 31
          %s130 = smul.addr %s129, 8
          %s131 = scalar_lea.vmem %s0, %s130
          %s132 = smul.u32 16, %s10
        $region28: #{tpu_custom_call.1} parent=23 // pred_fallthru
          _
      $region24: #{tpu_custom_call.1} parent=5 // pred_fallthru
        _
      %p133 = scmp.le.s32.totalorder 1, %s10
      %p134 = scmp.lt.s32.totalorder %s10, 3
      %p135 = pnand %p133, %p134
      %p136 = pneg %p135
      // Predicated region
      $region29: #{tpu_custom_call.1} parent=5 // pred_check
        _
      $region30: #{tpu_custom_call.1} parent=5 // pred_check_branch
        %138 = sbr.rel (%p135) target = $region32
      $region31: #{tpu_custom_call.1} parent=5 // pred_region
        %s139 = ssub.s32 %s10, 1
        %s140 = smul.u32 16, %s15
        %p141 = scmp.lt.s32.totalorder %s140, 31
        %s142 = scalar_select %p141, %s140, 31
        %s143 = smul.addr %s142, 8
        %s144 = scalar_lea.vmem %s0, %s143
        %p145 = pneg %p36
        %p146 = pneg %p33
        %p147 = pneg %p57
        %p148 = pneg %p54
        %p149 = pneg %p78
        %p150 = pneg %p75
        %p151 = pneg %p99
        %p152 = pneg %p96
        %s153 = smul.u32 16, %s15
        %p154 = scmp.lt.s32.totalorder %s153, 31
        %s155 = scalar_select %p154, %s153, 31
        %s156 = smul.addr %s155, 8
        %s157 = scalar_lea.vmem %s0, %s156
        %s158 = smul.u32 16, %s15
        %p160 = scmp.eq.s32.totalorder %s15, 0
        // Predicated region
        $region33: #{tpu_custom_call.1} parent=31 // pred_check
          %p161 = pneg %p160
        $region34: #{tpu_custom_call.1} parent=31 // pred_check_branch
          %163 = sbr.rel (%p161) target = $region36
        $region35: #{tpu_custom_call.1} parent=31 // pred_region
          %v164 = vlaneseq
          %vm165 = vcmp.ge.s32.totalorder %v164, 0
          %vm166 = vcmp.lt.s32.totalorder %v164, 512
          %vm167 = vmand %vm165, %vm166
          %168 = vst.msk [vmem:[#allocation2] sm:$0xf] %vm167, 0.0
          %169 = vst.msk [vmem:[#allocation3] sm:$0xf] %vm167, 0.0
          %170 = vst [vmem:[#allocation4] sm:$0xff] 0.0
        $region36: #{tpu_custom_call.1} parent=31 // pred_fallthru
          _
        %v171 = vld [vmem:[%s157] sm:$0xff]
        %v172 = vld [vmem:[%s157 + $0x8] sm:$0xff]
        %v173 = vld [vmem:[%s157 + $0x10] sm:$0xff]
        %v174 = vld [vmem:[%s157 + $0x18] sm:$0xff]
        %v175 = vld [vmem:[%s157 + $0x20] sm:$0xff]
        %v176 = vld [vmem:[%s157 + $0x28] sm:$0xff]
        %v177 = vld [vmem:[%s157 + $0x30] sm:$0xff]
        %v178 = vld [vmem:[%s157 + $0x38] sm:$0xff]
        %v179 = vld [vmem:[%s157 + $0x40] sm:$0xff]
        %v180 = vld [vmem:[%s157 + $0x48] sm:$0xff]
        %v181 = vld [vmem:[%s157 + $0x50] sm:$0xff]
        %v182 = vld [vmem:[%s157 + $0x58] sm:$0xff]
        %v183 = vld [vmem:[%s157 + $0x60] sm:$0xff]
        %v184 = vld [vmem:[%s157 + $0x68] sm:$0xff]
        %v185 = vld [vmem:[%s157 + $0x70] sm:$0xff]
        %v186 = vld [vmem:[%s157 + $0x78] sm:$0xff]
        %v187 = vpack.c.bf16 %v172, %v171
        %v188 = vpack.c.bf16 %v174, %v173
        %v189 = vpack.c.bf16 %v176, %v175
        %v190 = vpack.c.bf16 %v178, %v177
        %v191 = vpack.c.bf16 %v180, %v179
        %v192 = vpack.c.bf16 %v182, %v181
        %v193 = vpack.c.bf16 %v184, %v183
        %v194 = vpack.c.bf16 %v186, %v185
        %v195 = vld [vmem:[%s1] sm:$0xff]
        %v196 = vld [vmem:[%s1 + $0x8] sm:$0xff]
        %v197 = vld [vmem:[%s1 + $0x10] sm:$0xff]
        %v198 = vld [vmem:[%s1 + $0x18] sm:$0xff]
        %v199 = vld [vmem:[%s1 + $0x20] sm:$0xff]
        %v200 = vld [vmem:[%s1 + $0x28] sm:$0xff]
        %v201 = vld [vmem:[%s1 + $0x30] sm:$0xff]
        %v202 = vld [vmem:[%s1 + $0x38] sm:$0xff]
        %v211 = vunpack.c.l.b16 %v195
        %v212 = vunpack.c.h.b16 %v195
        %v213 = vunpack.c.l.b16 %v196
        %v214 = vunpack.c.h.b16 %v196
        %v215 = vunpack.c.l.b16 %v197
        %v216 = vunpack.c.h.b16 %v197
        %v217 = vunpack.c.l.b16 %v198
        %v218 = vunpack.c.h.b16 %v198
        %v219 = vunpack.c.l.b16 %v199
        %v220 = vunpack.c.h.b16 %v199
        %v221 = vunpack.c.l.b16 %v200
        %v222 = vunpack.c.h.b16 %v200
        %v223 = vunpack.c.l.b16 %v201
        %v224 = vunpack.c.h.b16 %v201
        %v225 = vunpack.c.l.b16 %v202
        %v226 = vunpack.c.h.b16 %v202
        %v227 = vpack.c.b16 %v215, %v211
        %v228 = vpack.c.b16 %v216, %v212
        %v229 = vpack.c.b16 %v217, %v213
        %v230 = vpack.c.b16 %v218, %v214
        %v231 = vpack.c.b16 %v223, %v219
        %v232 = vpack.c.b16 %v224, %v220
        %v233 = vpack.c.b16 %v225, %v221
        %v234 = vpack.c.b16 %v226, %v222
        %vm243 = vcmask 261120
        %v245 = vsel %vm243, %v187, 0
        %v248 = vsel %vm243, %v188, 0
        %v251 = vsel %vm243, %v189, 0
        %v254 = vsel %vm243, %v190, 0
        %v257 = vsel %vm243, %v191, 0
        %v260 = vsel %vm243, %v192, 0
        %v263 = vsel %vm243, %v193, 0
        %v266 = vsel %vm243, %v194, 0
        %268 = vmatprep.subr.bf16.mxu0 %v228
        %269 = vmatpush1.bf16.msra.mxu0 %v227
        %270 = vmatprep.subr.bf16.mxu0 %v232
        %271 = vmatpush1.bf16.msra.mxu0 %v231
        %272 = vmatprep.subr.bf16.mxu0 0
        %273 = vmatpush1.bf16.msra.mxu0 0
        %274 = vmatprep.subr.bf16.mxu0 0
        %275 = vmatpush1.bf16.msra.mxu0 0
        %276 = vmatprep.subr.bf16.mxu0 0
        %277 = vmatpush1.bf16.msra.mxu0 0
        %278 = vmatprep.subr.bf16.mxu0 0
        %279 = vmatpush1.bf16.msra.mxu0 0
        %280 = vmatprep.subr.bf16.mxu0 0
        %281 = vmatpush1.bf16.msra.mxu0 0
        %282 = vmatprep.subr.bf16.mxu0 0
        %283 = vmatpush1.bf16.msra.mxu0 0
        %284 = vmatprep.subr.bf16.mxu0 0
        %285 = vmatpush1.bf16.msra.mxu0 0
        %286 = vmatprep.subr.bf16.mxu0 0
        %287 = vmatpush1.bf16.msra.mxu0 0
        %288 = vmatprep.subr.bf16.mxu0 0
        %289 = vmatpush1.bf16.msra.mxu0 0
        %290 = vmatprep.subr.bf16.mxu0 0
        %291 = vmatpush1.bf16.msra.mxu0 0
        %292 = vmatprep.subr.bf16.mxu0 0
        %293 = vmatpush1.bf16.msra.mxu0 0
        %294 = vmatprep.subr.bf16.mxu0 0
        %295 = vmatpush1.bf16.msra.mxu0 0
        %296 = vmatprep.subr.bf16.mxu0 0
        %297 = vmatpush1.bf16.msra.mxu0 0
        %298 = vmatprep.subr.bf16.mxu0 0
        %299 = vmatpush1.bf16.msra.mxu0 0
        %300 = vmatprep.mubr.bf16.mxu0 0
        %301 = vmatmul.mubr.bf16.gmra.mrb[0].mxu0 %v245
        %v302 = vpop.f32.mrb[0].mxu0
        %v303 = vadd.f32 0.0, %v302
        %v304 = vpop.f32.mrb[0].mxu0
        %v305 = vadd.f32 0.0, %v304
        %v306 = vpop.f32.mrb[0].mxu0
        %v307 = vadd.f32 0.0, %v306
        %v308 = vpop.f32.mrb[0].mxu0
        %v309 = vadd.f32 0.0, %v308
        %310 = vmatprep.mubr.bf16.mxu0 0
        %311 = vmatmul.mubr.bf16.gmra.mrb[0].mxu0 %v248
        %v312 = vpop.f32.mrb[0].mxu0
        %v313 = vadd.f32 0.0, %v312
        %v314 = vpop.f32.mrb[0].mxu0
        %v315 = vadd.f32 0.0, %v314
        %v316 = vpop.f32.mrb[0].mxu0
        %v317 = vadd.f32 0.0, %v316
        %v318 = vpop.f32.mrb[0].mxu0
        %v319 = vadd.f32 0.0, %v318
        %320 = vmatprep.mubr.bf16.mxu0 0
        %321 = vmatmul.mubr.bf16.gmra.mrb[0].mxu0 %v251
        %v322 = vpop.f32.mrb[0].mxu0
        %v323 = vadd.f32 0.0, %v322
        %v324 = vpop.f32.mrb[0].mxu0
        %v325 = vadd.f32 0.0, %v324
        %v326 = vpop.f32.mrb[0].mxu0
        %v327 = vadd.f32 0.0, %v326
        %v328 = vpop.f32.mrb[0].mxu0
        %v329 = vadd.f32 0.0, %v328
        %330 = vmatprep.mubr.bf16.mxu0 0
        %331 = vmatmul.mubr.bf16.gmra.mrb[0].mxu0 %v254
        %v332 = vpop.f32.mrb[0].mxu0
        %v333 = vadd.f32 0.0, %v332
        %v334 = vpop.f32.mrb[0].mxu0
        %v335 = vadd.f32 0.0, %v334
        %v336 = vpop.f32.mrb[0].mxu0
        %v337 = vadd.f32 0.0, %v336
        %v338 = vpop.f32.mrb[0].mxu0
        %v339 = vadd.f32 0.0, %v338
        %340 = vmatprep.mubr.bf16.mxu0 0
        %341 = vmatmul.mubr.bf16.gmra.mrb[0].mxu0 %v257
        %v342 = vpop.f32.mrb[0].mxu0
        %v343 = vadd.f32 0.0, %v342
        %v344 = vpop.f32.mrb[0].mxu0
        %v345 = vadd.f32 0.0, %v344
        %v346 = vpop.f32.mrb[0].mxu0
        %v347 = vadd.f32 0.0, %v346
        %v348 = vpop.f32.mrb[0].mxu0
        %v349 = vadd.f32 0.0, %v348
        %350 = vmatprep.mubr.bf16.mxu0 0
        %351 = vmatmul.mubr.bf16.gmra.mrb[0].mxu0 %v260
        %v352 = vpop.f32.mrb[0].mxu0
        %v353 = vadd.f32 0.0, %v352
        %v354 = vpop.f32.mrb[0].mxu0
        %v355 = vadd.f32 0.0, %v354
        %v356 = vpop.f32.mrb[0].mxu0
        %v357 = vadd.f32 0.0, %v356
        %v358 = vpop.f32.mrb[0].mxu0
        %v359 = vadd.f32 0.0, %v358
        %360 = vmatprep.mubr.bf16.mxu0 0
        %361 = vmatmul.mubr.bf16.gmra.mrb[0].mxu0 %v263
        %v362 = vpop.f32.mrb[0].mxu0
        %v363 = vadd.f32 0.0, %v362
        %v364 = vpop.f32.mrb[0].mxu0
        %v365 = vadd.f32 0.0, %v364
        %v366 = vpop.f32.mrb[0].mxu0
        %v367 = vadd.f32 0.0, %v366
        %v368 = vpop.f32.mrb[0].mxu0
        %v369 = vadd.f32 0.0, %v368
        %370 = vmatprep.mubr.bf16.mxu0 0
        %371 = vmatmul.mubr.bf16.gmra.mrb[0].mxu0 %v266
        %v372 = vpop.f32.mrb[0].mxu0
        %v373 = vadd.f32 0.0, %v372
        %v374 = vpop.f32.mrb[0].mxu0
        %v375 = vadd.f32 0.0, %v374
        %v376 = vpop.f32.mrb[0].mxu0
        %v377 = vadd.f32 0.0, %v376
        %v378 = vpop.f32.mrb[0].mxu0
        %v379 = vadd.f32 0.0, %v378
        %380 = vdwg.mxu0
        %381 = vmatprep.subr.bf16.mxu0 %v230
        %382 = vmatpush1.bf16.msra.mxu0 %v229
        %383 = vmatprep.subr.bf16.mxu0 %v234
        %384 = vmatpush1.bf16.msra.mxu0 %v233
        %385 = vmatprep.subr.bf16.mxu0 0
        %386 = vmatpush1.bf16.msra.mxu0 0
        %387 = vmatprep.subr.bf16.mxu0 0
        %388 = vmatpush1.bf16.msra.mxu0 0
        %389 = vmatprep.subr.bf16.mxu0 0
        %390 = vmatpush1.bf16.msra.mxu0 0
        %391 = vmatprep.subr.bf16.mxu0 0
        %392 = vmatpush1.bf16.msra.mxu0 0
        %393 = vmatprep.subr.bf16.mxu0 0
        %394 = vmatpush1.bf16.msra.mxu0 0
        %395 = vmatprep.subr.bf16.mxu0 0
        %396 = vmatpush1.bf16.msra.mxu0 0
        %397 = vmatprep.subr.bf16.mxu0 0
        %398 = vmatpush1.bf16.msra.mxu0 0
        %399 = vmatprep.subr.bf16.mxu0 0
        %400 = vmatpush1.bf16.msra.mxu0 0
        %401 = vmatprep.subr.bf16.mxu0 0
        %402 = vmatpush1.bf16.msra.mxu0 0
        %403 = vmatprep.subr.bf16.mxu0 0
        %404 = vmatpush1.bf16.msra.mxu0 0
        %405 = vmatprep.subr.bf16.mxu0 0
        %406 = vmatpush1.bf16.msra.mxu0 0
        %407 = vmatprep.subr.bf16.mxu0 0
        %408 = vmatpush1.bf16.msra.mxu0 0
        %409 = vmatprep.subr.bf16.mxu0 0
        %410 = vmatpush1.bf16.msra.mxu0 0
        %411 = vmatprep.subr.bf16.mxu0 0
        %412 = vmatpush1.bf16.msra.mxu0 0
        %413 = vmatprep.mubr.bf16.mxu0 0
        %414 = vmatmul.mubr.bf16.gmra.mrb[0].mxu0 %v245
        %v415 = vpop.f32.mrb[0].mxu0
        %v416 = vadd.f32 0.0, %v415
        %v417 = vpop.f32.mrb[0].mxu0
        %v418 = vadd.f32 0.0, %v417
        %v419 = vpop.f32.mrb[0].mxu0
        %v420 = vadd.f32 0.0, %v419
        %v421 = vpop.f32.mrb[0].mxu0
        %v422 = vadd.f32 0.0, %v421
        %423 = vmatprep.mubr.bf16.mxu0 0
        %424 = vmatmul.mubr.bf16.gmra.mrb[0].mxu0 %v248
        %v425 = vpop.f32.mrb[0].mxu0
        %v426 = vadd.f32 0.0, %v425
        %v427 = vpop.f32.mrb[0].mxu0
        %v428 = vadd.f32 0.0, %v427
        %v429 = vpop.f32.mrb[0].mxu0
        %v430 = vadd.f32 0.0, %v429
        %v431 = vpop.f32.mrb[0].mxu0
        %v432 = vadd.f32 0.0, %v431
        %433 = vmatprep.mubr.bf16.mxu0 0
        %434 = vmatmul.mubr.bf16.gmra.mrb[0].mxu0 %v251
        %v435 = vpop.f32.mrb[0].mxu0
        %v436 = vadd.f32 0.0, %v435
        %v437 = vpop.f32.mrb[0].mxu0
        %v438 = vadd.f32 0.0, %v437
        %v439 = vpop.f32.mrb[0].mxu0
        %v440 = vadd.f32 0.0, %v439
        %v441 = vpop.f32.mrb[0].mxu0
        %v442 = vadd.f32 0.0, %v441
        %443 = vmatprep.mubr.bf16.mxu0 0
        %444 = vmatmul.mubr.bf16.gmra.mrb[0].mxu0 %v254
        %v445 = vpop.f32.mrb[0].mxu0
        %v446 = vadd.f32 0.0, %v445
        %v447 = vpop.f32.mrb[0].mxu0
        %v448 = vadd.f32 0.0, %v447
        %v449 = vpop.f32.mrb[0].mxu0
        %v450 = vadd.f32 0.0, %v449
        %v451 = vpop.f32.mrb[0].mxu0
        %v452 = vadd.f32 0.0, %v451
        %453 = vmatprep.mubr.bf16.mxu0 0
        %454 = vmatmul.mubr.bf16.gmra.mrb[0].mxu0 %v257
        %v455 = vpop.f32.mrb[0].mxu0
        %v456 = vadd.f32 0.0, %v455
        %v457 = vpop.f32.mrb[0].mxu0
        %v458 = vadd.f32 0.0, %v457
        %v459 = vpop.f32.mrb[0].mxu0
        %v460 = vadd.f32 0.0, %v459
        %v461 = vpop.f32.mrb[0].mxu0
        %v462 = vadd.f32 0.0, %v461
        %463 = vmatprep.mubr.bf16.mxu0 0
        %464 = vmatmul.mubr.bf16.gmra.mrb[0].mxu0 %v260
        %v465 = vpop.f32.mrb[0].mxu0
        %v466 = vadd.f32 0.0, %v465
        %v467 = vpop.f32.mrb[0].mxu0
        %v468 = vadd.f32 0.0, %v467
        %v469 = vpop.f32.mrb[0].mxu0
        %v470 = vadd.f32 0.0, %v469
        %v471 = vpop.f32.mrb[0].mxu0
        %v472 = vadd.f32 0.0, %v471
        %473 = vmatprep.mubr.bf16.mxu0 0
        %474 = vmatmul.mubr.bf16.gmra.mrb[0].mxu0 %v263
        %v475 = vpop.f32.mrb[0].mxu0
        %v476 = vadd.f32 0.0, %v475
        %v477 = vpop.f32.mrb[0].mxu0
        %v478 = vadd.f32 0.0, %v477
        %v479 = vpop.f32.mrb[0].mxu0
        %v480 = vadd.f32 0.0, %v479
        %v481 = vpop.f32.mrb[0].mxu0
        %v482 = vadd.f32 0.0, %v481
        %483 = vmatprep.mubr.bf16.mxu0 0
        %484 = vmatmul.mubr.bf16.gmra.mrb[0].mxu0 %v266
        %v485 = vpop.f32.mrb[0].mxu0
        %v486 = vadd.f32 0.0, %v485
        %v487 = vpop.f32.mrb[0].mxu0
        %v488 = vadd.f32 0.0, %v487
        %v489 = vpop.f32.mrb[0].mxu0
        %v490 = vadd.f32 0.0, %v489
        %v491 = vpop.f32.mrb[0].mxu0
        %v492 = vadd.f32 0.0, %v491
        %493 = vdwg.mxu0
        %v494 = vld [vmem:[#allocation2] sm:$0xf]
        %v495 = vadd.f32 %v303, %v307
        %v496 = vadd.f32 %v495, %v313
        %v497 = vadd.f32 %v496, %v317
        %v498 = vadd.f32 %v497, %v323
        %v499 = vadd.f32 %v498, %v327
        %v500 = vadd.f32 %v499, %v333
        %v501 = vadd.f32 %v500, %v337
        %v502 = vadd.f32 %v501, %v343
        %v503 = vadd.f32 %v502, %v347
        %v504 = vadd.f32 %v503, %v353
        %v505 = vadd.f32 %v504, %v357
        %v506 = vadd.f32 %v505, %v363
        %v507 = vadd.f32 %v506, %v367
        %v508 = vadd.f32 %v507, %v373
        %v509 = vadd.f32 %v508, %v377
        %v510 = vrot.slane %v509, 4
        %v511 = vadd.f32 %v509, %v510
        %v512 = vrot.slane %v511, 2
        %v513 = vadd.f32 %v511, %v512
        %v514 = vrot.slane %v513, 1
        %v515 = vadd.f32 %v513, %v514
        %v516 = vadd.f32 %v305, %v309
        %v517 = vadd.f32 %v516, %v315
        %v518 = vadd.f32 %v517, %v319
        %v519 = vadd.f32 %v518, %v325
        %v520 = vadd.f32 %v519, %v329
        %v521 = vadd.f32 %v520, %v335
        %v522 = vadd.f32 %v521, %v339
        %v523 = vadd.f32 %v522, %v345
        %v524 = vadd.f32 %v523, %v349
        %v525 = vadd.f32 %v524, %v355
        %v526 = vadd.f32 %v525, %v359
        %v527 = vadd.f32 %v526, %v365
        %v528 = vadd.f32 %v527, %v369
        %v529 = vadd.f32 %v528, %v375
        %v530 = vadd.f32 %v529, %v379
        %v531 = vrot.slane %v530, 4
        %v532 = vadd.f32 %v530, %v531
        %v533 = vrot.slane %v532, 2
        %v534 = vadd.f32 %v532, %v533
        %v535 = vrot.slane %v534, 1
        %v536 = vadd.f32 %v534, %v535
        %v537 = vadd.f32 %v416, %v420
        %v538 = vadd.f32 %v537, %v426
        %v539 = vadd.f32 %v538, %v430
        %v540 = vadd.f32 %v539, %v436
        %v541 = vadd.f32 %v540, %v440
        %v542 = vadd.f32 %v541, %v446
        %v543 = vadd.f32 %v542, %v450
        %v544 = vadd.f32 %v543, %v456
        %v545 = vadd.f32 %v544, %v460
        %v546 = vadd.f32 %v545, %v466
        %v547 = vadd.f32 %v546, %v470
        %v548 = vadd.f32 %v547, %v476
        %v549 = vadd.f32 %v548, %v480
        %v550 = vadd.f32 %v549, %v486
        %v551 = vadd.f32 %v550, %v490
        %v552 = vrot.slane %v551, 4
        %v553 = vadd.f32 %v551, %v552
        %v554 = vrot.slane %v553, 2
        %v555 = vadd.f32 %v553, %v554
        %v556 = vrot.slane %v555, 1
        %v557 = vadd.f32 %v555, %v556
        %v558 = vadd.f32 %v418, %v422
        %v559 = vadd.f32 %v558, %v428
        %v560 = vadd.f32 %v559, %v432
        %v561 = vadd.f32 %v560, %v438
        %v562 = vadd.f32 %v561, %v442
        %v563 = vadd.f32 %v562, %v448
        %v564 = vadd.f32 %v563, %v452
        %v565 = vadd.f32 %v564, %v458
        %v566 = vadd.f32 %v565, %v462
        %v567 = vadd.f32 %v566, %v468
        %v568 = vadd.f32 %v567, %v472
        %v569 = vadd.f32 %v568, %v478
        %v570 = vadd.f32 %v569, %v482
        %v571 = vadd.f32 %v570, %v488
        %v572 = vadd.f32 %v571, %v492
        %v573 = vrot.slane %v572, 4
        %v574 = vadd.f32 %v572, %v573
        %v575 = vrot.slane %v574, 2
        %v576 = vadd.f32 %v574, %v575
        %v577 = vrot.slane %v576, 1
        %v578 = vadd.f32 %v576, %v577
        %v583 = vcombine.low %v515, %v536
        %v584 = vcombine.low %v557, %v578
        %v586 = vunpack.c.l.s4 1966171168
        %v587 = vunpack.c.0.s8 %v586
        %v588 = vlaneseq
        %v589 = vshrl.u32 %v588, 7
        %v590 = vsub.s32 %v587, %v589
        %v591 = vrot.slane %v583, %v590
        %v593 = vunpack.c.l.s4 1966171168
        %v594 = vunpack.c.0.s8 %v593
        %v595 = vlaneseq
        %v596 = vshrl.u32 %v595, 7
        %v597 = vsub.s32 %v594, %v596
        %v598 = vrot.slane %v584, %v597
        %v599 = vcombine.low %v591, %v598
        %v601 = vunpack.c.l.s4 1966171168
        %v602 = vunpack.c.0.s8 %v601
        %v603 = vlaneseq
        %v604 = vshrl.u32 %v603, 7
        %v605 = vsub.s32 %v602, %v604
        %v606 = vrot.slane %v599, %v605
        %v608 = vadd.f32 %v494, %v606
        %v609 = vlaneseq
        %vm610 = vcmp.ge.s32.totalorder %v609, 0
        %vm611 = vcmp.lt.s32.totalorder %v609, 512
        %vm612 = vmand %vm610, %vm611
        %613 = vst.msk [vmem:[#allocation2] sm:$0xf] %vm612, %v608
        %v614 = vld [vmem:[#allocation3] sm:$0xf]
        %v615 = vmul.f32 %v303, %v303
        %v616 = vmul.f32 %v305, %v305
        %v617 = vmul.f32 %v416, %v416
        %v618 = vmul.f32 %v418, %v418
        %v619 = vmul.f32 %v307, %v307
        %v620 = vmul.f32 %v309, %v309
        %v621 = vmul.f32 %v420, %v420
        %v622 = vmul.f32 %v422, %v422
        %v623 = vmul.f32 %v313, %v313
        %v624 = vmul.f32 %v315, %v315
        %v625 = vmul.f32 %v426, %v426
        %v626 = vmul.f32 %v428, %v428
        %v627 = vmul.f32 %v317, %v317
        %v628 = vmul.f32 %v319, %v319
        %v629 = vmul.f32 %v430, %v430
        %v630 = vmul.f32 %v432, %v432
        %v631 = vmul.f32 %v323, %v323
        %v632 = vmul.f32 %v325, %v325
        %v633 = vmul.f32 %v436, %v436
        %v634 = vmul.f32 %v438, %v438
        %v635 = vmul.f32 %v327, %v327
        %v636 = vmul.f32 %v329, %v329
        %v637 = vmul.f32 %v440, %v440
        %v638 = vmul.f32 %v442, %v442
        %v639 = vmul.f32 %v333, %v333
        %v640 = vmul.f32 %v335, %v335
        %v641 = vmul.f32 %v446, %v446
        %v642 = vmul.f32 %v448, %v448
        %v643 = vmul.f32 %v337, %v337
        %v644 = vmul.f32 %v339, %v339
        %v645 = vmul.f32 %v450, %v450
        %v646 = vmul.f32 %v452, %v452
        %v647 = vmul.f32 %v343, %v343
        %v648 = vmul.f32 %v345, %v345
        %v649 = vmul.f32 %v456, %v456
        %v650 = vmul.f32 %v458, %v458
        %v651 = vmul.f32 %v347, %v347
        %v652 = vmul.f32 %v349, %v349
        %v653 = vmul.f32 %v460, %v460
        %v654 = vmul.f32 %v462, %v462
        %v655 = vmul.f32 %v353, %v353
        %v656 = vmul.f32 %v355, %v355
        %v657 = vmul.f32 %v466, %v466
        %v658 = vmul.f32 %v468, %v468
        %v659 = vmul.f32 %v357, %v357
        %v660 = vmul.f32 %v359, %v359
        %v661 = vmul.f32 %v470, %v470
        %v662 = vmul.f32 %v472, %v472
        %v663 = vmul.f32 %v363, %v363
        %v664 = vmul.f32 %v365, %v365
        %v665 = vmul.f32 %v476, %v476
        %v666 = vmul.f32 %v478, %v478
        %v667 = vmul.f32 %v367, %v367
        %v668 = vmul.f32 %v369, %v369
        %v669 = vmul.f32 %v480, %v480
        %v670 = vmul.f32 %v482, %v482
        %v671 = vmul.f32 %v373, %v373
        %v672 = vmul.f32 %v375, %v375
        %v673 = vmul.f32 %v486, %v486
        %v674 = vmul.f32 %v488, %v488
        %v675 = vmul.f32 %v377, %v377
        %v676 = vmul.f32 %v379, %v379
        %v677 = vmul.f32 %v490, %v490
        %v678 = vmul.f32 %v492, %v492
        %v679 = vadd.f32 %v615, %v619
        %v680 = vadd.f32 %v679, %v623
        %v681 = vadd.f32 %v680, %v627
        %v682 = vadd.f32 %v681, %v631
        %v683 = vadd.f32 %v682, %v635
        %v684 = vadd.f32 %v683, %v639
        %v685 = vadd.f32 %v684, %v643
        %v686 = vadd.f32 %v685, %v647
        %v687 = vadd.f32 %v686, %v651
        %v688 = vadd.f32 %v687, %v655
        %v689 = vadd.f32 %v688, %v659
        %v690 = vadd.f32 %v689, %v663
        %v691 = vadd.f32 %v690, %v667
        %v692 = vadd.f32 %v691, %v671
        %v693 = vadd.f32 %v692, %v675
        %v694 = vrot.slane %v693, 4
        %v695 = vadd.f32 %v693, %v694
        %v696 = vrot.slane %v695, 2
        %v697 = vadd.f32 %v695, %v696
        %v698 = vrot.slane %v697, 1
        %v699 = vadd.f32 %v697, %v698
        %v700 = vadd.f32 %v616, %v620
        %v701 = vadd.f32 %v700, %v624
        %v702 = vadd.f32 %v701, %v628
        %v703 = vadd.f32 %v702, %v632
        %v704 = vadd.f32 %v703, %v636
        %v705 = vadd.f32 %v704, %v640
        %v706 = vadd.f32 %v705, %v644
        %v707 = vadd.f32 %v706, %v648
        %v708 = vadd.f32 %v707, %v652
        %v709 = vadd.f32 %v708, %v656
        %v710 = vadd.f32 %v709, %v660
        %v711 = vadd.f32 %v710, %v664
        %v712 = vadd.f32 %v711, %v668
        %v713 = vadd.f32 %v712, %v672
        %v714 = vadd.f32 %v713, %v676
        %v715 = vrot.slane %v714, 4
        %v716 = vadd.f32 %v714, %v715
        %v717 = vrot.slane %v716, 2
        %v718 = vadd.f32 %v716, %v717
        %v719 = vrot.slane %v718, 1
        %v720 = vadd.f32 %v718, %v719
        %v721 = vadd.f32 %v617, %v621
        %v722 = vadd.f32 %v721, %v625
        %v723 = vadd.f32 %v722, %v629
        %v724 = vadd.f32 %v723, %v633
        %v725 = vadd.f32 %v724, %v637
        %v726 = vadd.f32 %v725, %v641
        %v727 = vadd.f32 %v726, %v645
        %v728 = vadd.f32 %v727, %v649
        %v729 = vadd.f32 %v728, %v653
        %v730 = vadd.f32 %v729, %v657
        %v731 = vadd.f32 %v730, %v661
        %v732 = vadd.f32 %v731, %v665
        %v733 = vadd.f32 %v732, %v669
        %v734 = vadd.f32 %v733, %v673
        %v735 = vadd.f32 %v734, %v677
        %v736 = vrot.slane %v735, 4
        %v737 = vadd.f32 %v735, %v736
        %v738 = vrot.slane %v737, 2
        %v739 = vadd.f32 %v737, %v738
        %v740 = vrot.slane %v739, 1
        %v741 = vadd.f32 %v739, %v740
        %v742 = vadd.f32 %v618, %v622
        %v743 = vadd.f32 %v742, %v626
        %v744 = vadd.f32 %v743, %v630
        %v745 = vadd.f32 %v744, %v634
        %v746 = vadd.f32 %v745, %v638
        %v747 = vadd.f32 %v746, %v642
        %v748 = vadd.f32 %v747, %v646
        %v749 = vadd.f32 %v748, %v650
        %v750 = vadd.f32 %v749, %v654
        %v751 = vadd.f32 %v750, %v658
        %v752 = vadd.f32 %v751, %v662
        %v753 = vadd.f32 %v752, %v666
        %v754 = vadd.f32 %v753, %v670
        %v755 = vadd.f32 %v754, %v674
        %v756 = vadd.f32 %v755, %v678
        %v757 = vrot.slane %v756, 4
        %v758 = vadd.f32 %v756, %v757
        %v759 = vrot.slane %v758, 2
        %v760 = vadd.f32 %v758, %v759
        %v761 = vrot.slane %v760, 1
        %v762 = vadd.f32 %v760, %v761
        %v767 = vcombine.low %v699, %v720
        %v768 = vcombine.low %v741, %v762
        %v770 = vunpack.c.l.s4 1966171168
        %v771 = vunpack.c.0.s8 %v770
        %v772 = vlaneseq
        %v773 = vshrl.u32 %v772, 7
        %v774 = vsub.s32 %v771, %v773
        %v775 = vrot.slane %v767, %v774
        %v777 = vunpack.c.l.s4 1966171168
        %v778 = vunpack.c.0.s8 %v777
        %v779 = vlaneseq
        %v780 = vshrl.u32 %v779, 7
        %v781 = vsub.s32 %v778, %v780
        %v782 = vrot.slane %v768, %v781
        %v783 = vcombine.low %v775, %v782
        %v785 = vunpack.c.l.s4 1966171168
        %v786 = vunpack.c.0.s8 %v785
        %v787 = vlaneseq
        %v788 = vshrl.u32 %v787, 7
        %v789 = vsub.s32 %v786, %v788
        %v790 = vrot.slane %v783, %v789
        %v792 = vadd.f32 %v614, %v790
        %793 = vst.msk [vmem:[#allocation3] sm:$0xf] %vm612, %v792
        %p794 = scmp.eq.s32.totalorder %s15, 1
        // Predicated region
        $region37: #{tpu_custom_call.1} parent=31 // pred_check
          %p795 = pneg %p794
        $region38: #{tpu_custom_call.1} parent=31 // pred_check_branch
          %797 = sbr.rel (%p795) target = $region40
        $region39: #{tpu_custom_call.1} parent=31 // pred_region
          %v798 = vld [vmem:[#allocation2] sm:$0xf]
          %v799 = vmul.f32 %v798, 0.00390625
          %v800 = vld [vmem:[#allocation3] sm:$0xf]
          %v801 = vmul.f32 %v800, 0.00390625
          %v802 = vmul.f32 %v799, %v799
          %v803 = vsub.f32 %v801, %v802
          %v804 = vmax.f32 %v803, 0.0
          %v805 = vadd.f32 %v804, 1e-05
          %v806 = vrsqrt.pop %v805
          %v807 = vld [vmem:[%s2] ss:$2 sm:$0xf]
          %v808 = vmul.f32 %v807, %v806
          %809 = vst.msk [vmem:[#allocation4] ss:$2 sm:$0xf] %vm612, %v808
          %s810 = scalar_lea.vmem %s2, 1
          %v811 = vld [vmem:[%s810] ss:$2 sm:$0xf]
          %v812 = vmul.f32 %v799, %v808
          %v813 = vsub.f32 %v811, %v812
          %s814 = scalar_lea.vmem [#allocation4], 1
          %815 = vst.msk [vmem:[%s814] ss:$2 sm:$0xf] %vm612, %v813
        $region40: #{tpu_custom_call.1} parent=31 // pred_fallthru
          _
        // Predicated region
        $region41: #{tpu_custom_call.1} parent=31 // pred_check
          %p816 = pneg %p96
        $region42: #{tpu_custom_call.1} parent=31 // pred_check_branch
          %818 = sbr.rel (%p816) target = $region44
        $region43: #{tpu_custom_call.1} parent=31 // pred_region
          %s820 = ssub.s32 128, 128
          %821 = vsyncadd [#allocation5], %s820
          %s823 = sshll.u32 [#allocation4], 4
          %s824 = int_to_ptr.vmem [resolvable:$true] %s823
          %826 = dma.vmem_to_hbm [thread:$0]  %s824, 128, %s3, [#allocation5]
        $region44: #{tpu_custom_call.1} parent=31 // pred_fallthru
          _
        // Predicated region
        $region45: #{tpu_custom_call.1} parent=31 // pred_check
          %p827 = pneg %p96
        $region46: #{tpu_custom_call.1} parent=31 // pred_check_branch
          %829 = sbr.rel (%p827) target = $region48
        $region47: #{tpu_custom_call.1} parent=31 // pred_region
          %830 = dma.done [#allocation5], 128
        $region48: #{tpu_custom_call.1} parent=31 // pred_fallthru
          _
      $region32: #{tpu_custom_call.1} parent=5 // pred_fallthru
        _
      %p831 = scmp.le.s32.totalorder 2, %s10
      // Predicated region
      $region49: #{tpu_custom_call.1} parent=5 // pred_check
        %p832 = pneg %p831
      $region50: #{tpu_custom_call.1} parent=5 // pred_check_branch
        %834 = sbr.rel (%p832) target = $region52
      $region51: #{tpu_custom_call.1} parent=5 // pred_region
        %s835 = ssub.s32 %s10, 2
      $region52: #{tpu_custom_call.1} parent=5 // pred_fallthru
        _
    $region6: #{tpu_custom_call.1} parent=1 // loop_footer
      %s14 = sadd.s32 1, %s10
    $region7: #{tpu_custom_call.1} parent=1 // loop_footer_branch
      %9 = sbr.rel target = $region3
    $region8: #{tpu_custom_call.1} parent=1 // loop_exit
      _
    %836 = vsyncpa [#allocation5], 1
    %s837 = scalar_lea.sflag [#allocation5], 1
    %838 = vsyncpa %s837, 1

</llo_original>
